<compile_context>
chip_gen: v5e
topology: v5e:2x2
jax: 0.10.0
libtpu: 0.0.40
codegen_flags: <defaults>
</compile_context>

<pallas_src>
import functools

import jax
import jax.numpy as jnp
from jax.experimental import pallas as pl
from jax.experimental.pallas import tpu as pltpu

LANE = 128  # TPU lane width: last-dim blocks must be 128-wide (or full dim)


def _round_up(n, m):
    return ((n + m - 1) // m) * m


# ----------------------------- Pallas kernel --------------------------------

def _mm_bias_act_kernel(a_ref, b_ref, bias_ref, o_ref, acc_ref, *,
                        add_bias, apply_relu):
    """One (row-tile i, contraction-tile k) step of O = A @ B (+ bias)(+ReLU)."""
    k = pl.program_id(1)

    @pl.when(k == 0)
    def _init():
        acc_ref[...] = jnp.zeros_like(acc_ref)

    # bf16 x bf16 -> f32 accumulate on the MXU.
    acc_ref[...] += jnp.dot(
        a_ref[...], b_ref[...], preferred_element_type=jnp.float32
    )

    @pl.when(k == pl.num_programs(1) - 1)
    def _finalize():
        h = acc_ref[...]
        if add_bias:
            h = h + bias_ref[...]          # bias once, in finalize
        if apply_relu:
            h = jnp.maximum(h, 0.0)
        o_ref[...] = h.astype(o_ref.dtype)


def matmul_bias_act(a, b, bias, *, add_bias, apply_relu, out_dtype,
                    tm=128, tk=128):
    """Tiled O = A @ B (+ bias)(+ ReLU) with f32 VMEM accumulator."""
    m, k_dim = a.shape
    k2, n = b.shape
    assert k_dim == k2
    assert m % tm == 0 and k_dim % tk == 0 and n % LANE == 0

    n_row_tiles = m // tm
    n_k_tiles = k_dim // tk

    flops = 2 * m * k_dim * n
    bytes_accessed = (
        a.size * a.dtype.itemsize
        + b.size * b.dtype.itemsize * n_row_tiles
        + bias.size * bias.dtype.itemsize
        + m * n * jnp.dtype(out_dtype).itemsize
    )

    kernel = functools.partial(
        _mm_bias_act_kernel, add_bias=add_bias, apply_relu=apply_relu
    )
    return pl.pallas_call(
        kernel,
        out_shape=jax.ShapeDtypeStruct((m, n), out_dtype),
        grid_spec=pltpu.PrefetchScalarGridSpec(
            num_scalar_prefetch=0,
            grid=(n_row_tiles, n_k_tiles),
            in_specs=[
                pl.BlockSpec((tm, tk), lambda i, k: (i, k)),   # A tile
                pl.BlockSpec((tk, n), lambda i, k: (k, 0)),    # B k-slab (lane-dense)
                pl.BlockSpec((1, n), lambda i, k: (0, 0)),     # bias (resident)
            ],
            out_specs=pl.BlockSpec((tm, n), lambda i, k: (i, 0)),
            scratch_shapes=[pltpu.VMEM((tm, n), jnp.float32)],
        ),
        compiler_params=pltpu.CompilerParams(
            dimension_semantics=("parallel", "arbitrary")
        ),
        cost_estimate=pl.CostEstimate(
            flops=flops, transcendentals=0, bytes_accessed=bytes_accessed
        ),
    )(a, b, bias)


def gcn_layer(a_hat, x, w, b2d, *, apply_relu, out_dtype, tm=128, tk=128):
    """One GCNConv layer on padded inputs: A_hat @ (x @ w) + b, optional ReLU."""
    # Stage 1: feature transform XW (no bias), emitted bf16 for stage-2 MXU.
    zero_bias = jnp.zeros((1, w.shape[1]), jnp.float32)
    xw = matmul_bias_act(
        x, w, zero_bias, add_bias=False, apply_relu=False,
        out_dtype=jnp.bfloat16, tm=tm, tk=tk,
    )
    # Stage 2: neighborhood aggregation A_hat @ XW + b (+ReLU).
    return matmul_bias_act(
        a_hat, xw, b2d, add_bias=True, apply_relu=apply_relu,
        out_dtype=out_dtype, tm=tm, tk=tk,
    )


# ------------------------------ JAX glue -------------------------------------

def normalized_adjacency(edge_index, num_nodes):
    """Dense A_hat = D^{-1/2} (A + I) D^{-1/2}  (GCNConv default normalization)."""
    src, dst = edge_index[0], edge_index[1]
    a = jnp.zeros((num_nodes, num_nodes), jnp.float32)
    # message flows src -> dst; aggregation row = dst, col = src
    a = a.at[dst, src].add(1.0)
    a = a + jnp.eye(num_nodes, dtype=jnp.float32)  # self-loops
    deg = jnp.sum(a, axis=1)
    d_inv_sqrt = jnp.where(deg > 0, 1.0 / jnp.sqrt(deg), 0.0)
    return d_inv_sqrt[:, None] * a * d_inv_sqrt[None, :]


def gcn_forward(params, x, edge_index, *, tm=128, tk=128):
    n, f_in = x.shape
    hidden = params["w1"].shape[1]
    out_dim = params["w2"].shape[1]

    n_p = _round_up(n, max(tm, tk))
    f_in_p = _round_up(f_in, LANE)
    hid_p = _round_up(hidden, LANE)
    out_p = _round_up(out_dim, LANE)

    # Dense normalized adjacency, zero-padded, stored bf16 (dominant HBM stream).
    a_hat = normalized_adjacency(edge_index, n)
    a_pad = jnp.zeros((n_p, n_p), jnp.bfloat16).at[:n, :n].set(
        a_hat.astype(jnp.bfloat16)
    )

    # Zero-padded bf16 features / weights, f32 biases.  Padding keeps results
    # exact on the logical slice: padded rows/cols of A_hat and W are zero.
    x_pad = jnp.zeros((n_p, f_in_p), jnp.bfloat16).at[:n, :f_in].set(
        x.astype(jnp.bfloat16)
    )
    w1_pad = jnp.zeros((f_in_p, hid_p), jnp.bfloat16).at[:f_in, :hidden].set(
        params["w1"].astype(jnp.bfloat16)
    )
    b1_pad = jnp.zeros((1, hid_p), jnp.float32).at[0, :hidden].set(params["b1"])
    w2_pad = jnp.zeros((hid_p, out_p), jnp.bfloat16).at[:hidden, :out_dim].set(
        params["w2"].astype(jnp.bfloat16)
    )
    b2_pad = jnp.zeros((1, out_p), jnp.float32).at[0, :out_dim].set(params["b2"])

    # Layer 1: conv1 + ReLU, emitted bf16 (feeds layer-2 MXU directly).
    h = gcn_layer(a_pad, x_pad, w1_pad, b1_pad,
                  apply_relu=True, out_dtype=jnp.bfloat16, tm=tm, tk=tk)
    # Layer 2: conv2, f32 logits.
    out = gcn_layer(a_pad, h, w2_pad, b2_pad,
                    apply_relu=False, out_dtype=jnp.float32, tm=tm, tk=tk)
    return out[:n, :out_dim]


def init_params(key, input_dim, hidden_dim, out_dim):
    k1, k2 = jax.random.split(key)

    def glorot(k, fan_in, fan_out):
        limit = jnp.sqrt(6.0 / (fan_in + fan_out))
        return jax.random.uniform(k, (fan_in, fan_out), jnp.float32, -limit, limit)

    return {
        "w1": glorot(k1, input_dim, hidden_dim),
        "b1": jnp.zeros((hidden_dim,), jnp.float32),
        "w2": glorot(k2, hidden_dim, out_dim),
        "b2": jnp.zeros((out_dim,), jnp.float32),
    }


# ------------------------------- main -----------------------------------------

if __name__ == "__main__":
    key = jax.random.PRNGKey(0)
    kx, ke, kp = jax.random.split(key, 3)

    num_nodes = 16
    input_dim = 8
    hidden_dim = 32
    out_dim = 4
    num_edges = 40

    # deterministic synthetic graph + node features (data.x, data.edge_index)
    x = jax.random.normal(kx, (num_nodes, input_dim), jnp.float32)
    edge_index = jax.random.randint(ke, (2, num_edges), 0, num_nodes, jnp.int32)

    params = init_params(kp, input_dim, hidden_dim, out_dim)

    out = jax.jit(gcn_forward)(params, x, edge_index)
    jax.block_until_ready(out)

    assert out.shape == (num_nodes, out_dim)
    assert bool(jnp.all(jnp.isfinite(out)))
    print("KERNEL_OK")
</pallas_src>

<mosaic_0001>
module attributes {stable_mosaic.version = 11 : i64} {
  func.func @_mm_bias_act_kernel(%arg0: i32, %arg1: i32, %arg2: memref<128x128xbf16, #tpu.memory_space<vmem>>, %arg3: memref<128x128xbf16, #tpu.memory_space<vmem>>, %arg4: memref<1x128xf32, #tpu.memory_space<vmem>>, %arg5: memref<128x128xbf16, #tpu.memory_space<vmem>>, %arg6: memref<128x128xf32, #tpu.memory_space<vmem>>) attributes {dimension_semantics = [#tpu.dimension_semantics<parallel>, #tpu.dimension_semantics<arbitrary>], iteration_bounds = array<i64: 1, 1>, scalar_prefetch = 0 : i64, scratch_operands = 1 : i64, tpu.core_type = #tpu.core_type<tc>, window_params = [{transform_indices = @transform_0, window_bounds = array<i64: 128, 128>}, {transform_indices = @transform_1, window_bounds = array<i64: 128, 128>}, {pipeline_mode = #tpu.pipeline_mode<synchronous>, transform_indices = @transform_2, window_bounds = array<i64: 1, 128>}, {transform_indices = @transform_3, window_bounds = array<i64: 128, 128>}]} {
    %c0_i32 = arith.constant 0 : i32
    %0 = arith.cmpi eq, %arg1, %c0_i32 : i32
    %1 = arith.extui %0 : i1 to i32
    %c0_i32_0 = arith.constant 0 : i32
    %2 = arith.cmpi ne, %1, %c0_i32_0 : i32
    scf.if %2 {
      %cst_10 = arith.constant 0.000000e+00 : f32
      %12 = vector.broadcast %cst_10 : f32 to vector<128x128xf32>
      %c0_11 = arith.constant 0 : index
      %c0_12 = arith.constant 0 : index
      %13 = vector.load %arg6[%c0_11, %c0_12] : memref<128x128xf32, #tpu.memory_space<vmem>>, vector<128x128xf32>
      tpu.vector_store %arg6[%c0_11, %c0_12], %12 {strides = array<i32>} : memref<128x128xf32, #tpu.memory_space<vmem>>, vector<128x128xf32>,
    } else {
    }
    %c0 = arith.constant 0 : index
    %c0_1 = arith.constant 0 : index
    %3 = vector.load %arg6[%c0, %c0_1] : memref<128x128xf32, #tpu.memory_space<vmem>>, vector<128x128xf32>
    %c0_2 = arith.constant 0 : index
    %c0_3 = arith.constant 0 : index
    %4 = vector.load %arg2[%c0_2, %c0_3] : memref<128x128xbf16, #tpu.memory_space<vmem>>, vector<128x128xbf16>
    %c0_4 = arith.constant 0 : index
    %c0_5 = arith.constant 0 : index
    %5 = vector.load %arg3[%c0_4, %c0_5] : memref<128x128xbf16, #tpu.memory_space<vmem>>, vector<128x128xbf16>
    %cst = arith.constant dense<0.000000e+00> : vector<128x128xf32>
    %6 = tpu.matmul %4, %5, %cst {dimension_numbers = #tpu.dot_dimension_numbers<[1], [0], [0], [1], [0, 0, 1, 1], [], []>} : vector<128x128xbf16>, vector<128x128xbf16>, vector<128x128xf32> -> vector<128x128xf32>
    %7 = arith.addf %3, %6 : vector<128x128xf32>
    %c0_6 = arith.constant 0 : index
    %c0_7 = arith.constant 0 : index
    %8 = vector.load %arg6[%c0_6, %c0_7] : memref<128x128xf32, #tpu.memory_space<vmem>>, vector<128x128xf32>
    tpu.vector_store %arg6[%c0_6, %c0_7], %7 {strides = array<i32>} : memref<128x128xf32, #tpu.memory_space<vmem>>, vector<128x128xf32>,
    %c0_i32_8 = arith.constant 0 : i32
    %9 = arith.cmpi eq, %arg1, %c0_i32_8 : i32
    %10 = arith.extui %9 : i1 to i32
    %c0_i32_9 = arith.constant 0 : i32
    %11 = arith.cmpi ne, %10, %c0_i32_9 : i32
    scf.if %11 {
      %c0_10 = arith.constant 0 : index
      %c0_11 = arith.constant 0 : index
      %12 = vector.load %arg6[%c0_10, %c0_11] : memref<128x128xf32, #tpu.memory_space<vmem>>, vector<128x128xf32>
      %13 = arith.truncf %12 : vector<128x128xf32> to vector<128x128xbf16>
      %c0_12 = arith.constant 0 : index
      %c0_13 = arith.constant 0 : index
      %14 = vector.load %arg5[%c0_12, %c0_13] : memref<128x128xbf16, #tpu.memory_space<vmem>>, vector<128x128xbf16>
      tpu.vector_store %arg5[%c0_12, %c0_13], %13 {strides = array<i32>} : memref<128x128xbf16, #tpu.memory_space<vmem>>, vector<128x128xbf16>,
    } else {
    }
    return
  }
  func.func @transform_0(%arg0: i32, %arg1: i32) -> (i32, i32) {
    %c0_i32 = arith.constant 0 : i32
    return %arg0, %arg1 : i32, i32
  }
  func.func @transform_1(%arg0: i32, %arg1: i32) -> (i32, i32) {
    %c0_i32 = arith.constant 0 : i32
    %c0_i32_0 = arith.constant 0 : i32
    return %arg1, %c0_i32 : i32, i32
  }
  func.func @transform_2(%arg0: i32, %arg1: i32) -> (i32, i32) {
    %c0_i32 = arith.constant 0 : i32
    %c0_i32_0 = arith.constant 0 : i32
    %c0_i32_1 = arith.constant 0 : i32
    return %c0_i32, %c0_i32_0 : i32, i32
  }
  func.func @transform_3(%arg0: i32, %arg1: i32) -> (i32, i32) {
    %c0_i32 = arith.constant 0 : i32
    %c0_i32_0 = arith.constant 0 : i32
    return %arg0, %c0_i32 : i32, i32
  }
}

module attributes {stable_mosaic.version = 11 : i64} {
  func.func @_mm_bias_act_kernel(%arg0: i32, %arg1: i32, %arg2: memref<128x128xbf16, #tpu.memory_space<vmem>>, %arg3: memref<128x128xbf16, #tpu.memory_space<vmem>>, %arg4: memref<1x128xf32, #tpu.memory_space<vmem>>, %arg5: memref<128x128xbf16, #tpu.memory_space<vmem>>, %arg6: memref<128x128xf32, #tpu.memory_space<vmem>>) attributes {dimension_semantics = [#tpu.dimension_semantics<parallel>, #tpu.dimension_semantics<arbitrary>], iteration_bounds = array<i64: 1, 1>, scalar_prefetch = 0 : i64, scratch_operands = 1 : i64, tpu.core_type = #tpu.core_type<tc>, window_params = [{transform_indices = @transform_0, window_bounds = array<i64: 128, 128>}, {transform_indices = @transform_1, window_bounds = array<i64: 128, 128>}, {pipeline_mode = #tpu.pipeline_mode<synchronous>, transform_indices = @transform_2, window_bounds = array<i64: 1, 128>}, {transform_indices = @transform_3, window_bounds = array<i64: 128, 128>}]} {
    %c0_i32 = arith.constant 0 : i32
    %0 = arith.cmpi eq, %arg1, %c0_i32 : i32
    %1 = arith.extui %0 : i1 to i32
    %c0_i32_0 = arith.constant 0 : i32
    %2 = arith.cmpi ne, %1, %c0_i32_0 : i32
    scf.if %2 {
      %cst_10 = arith.constant 0.000000e+00 : f32
      %12 = vector.broadcast %cst_10 : f32 to vector<128x128xf32>
      %c0_11 = arith.constant 0 : index
      %c0_12 = arith.constant 0 : index
      %13 = vector.load %arg6[%c0_11, %c0_12] : memref<128x128xf32, #tpu.memory_space<vmem>>, vector<128x128xf32>
      tpu.vector_store %arg6[%c0_11, %c0_12], %12 {strides = array<i32>} : memref<128x128xf32, #tpu.memory_space<vmem>>, vector<128x128xf32>,
    } else {
    }
    %c0 = arith.constant 0 : index
    %c0_1 = arith.constant 0 : index
    %3 = vector.load %arg6[%c0, %c0_1] : memref<128x128xf32, #tpu.memory_space<vmem>>, vector<128x128xf32>
    %c0_2 = arith.constant 0 : index
    %c0_3 = arith.constant 0 : index
    %4 = vector.load %arg2[%c0_2, %c0_3] : memref<128x128xbf16, #tpu.memory_space<vmem>>, vector<128x128xbf16>
    %c0_4 = arith.constant 0 : index
    %c0_5 = arith.constant 0 : index
    %5 = vector.load %arg3[%c0_4, %c0_5] : memref<128x128xbf16, #tpu.memory_space<vmem>>, vector<128x128xbf16>
    %cst = arith.constant dense<0.000000e+00> : vector<128x128xf32>
    %6 = tpu.matmul %4, %5, %cst {dimension_numbers = #tpu.dot_dimension_numbers<[1], [0], [0], [1], [0, 0, 1, 1], [], []>} : vector<128x128xbf16>, vector<128x128xbf16>, vector<128x128xf32> -> vector<128x128xf32>
    %7 = arith.addf %3, %6 : vector<128x128xf32>
    %c0_6 = arith.constant 0 : index
    %c0_7 = arith.constant 0 : index
    %8 = vector.load %arg6[%c0_6, %c0_7] : memref<128x128xf32, #tpu.memory_space<vmem>>, vector<128x128xf32>
    tpu.vector_store %arg6[%c0_6, %c0_7], %7 {strides = array<i32>} : memref<128x128xf32, #tpu.memory_space<vmem>>, vector<128x128xf32>,
    %c0_i32_8 = arith.constant 0 : i32
    %9 = arith.cmpi eq, %arg1, %c0_i32_8 : i32
    %10 = arith.extui %9 : i1 to i32
    %c0_i32_9 = arith.constant 0 : i32
    %11 = arith.cmpi ne, %10, %c0_i32_9 : i32
    scf.if %11 {
      %c0_10 = arith.constant 0 : index
      %c0_11 = arith.constant 0 : index
      %12 = vector.load %arg6[%c0_10, %c0_11] : memref<128x128xf32, #tpu.memory_space<vmem>>, vector<128x128xf32>
      %c0_12 = arith.constant 0 : index
      %c0_13 = arith.constant 0 : index
      %13 = vector.load %arg4[%c0_12, %c0_13] : memref<1x128xf32, #tpu.memory_space<vmem>>, vector<1x128xf32>
      %14 = vector.broadcast %13 : vector<1x128xf32> to vector<128x128xf32>
      %15 = arith.addf %12, %14 : vector<128x128xf32>
      %cst_14 = arith.constant 0.000000e+00 : f32
      %16 = vector.broadcast %cst_14 : f32 to vector<128x128xf32>
      %17 = arith.maximumf %15, %16 : vector<128x128xf32>
      %18 = arith.truncf %17 : vector<128x128xf32> to vector<128x128xbf16>
      %c0_15 = arith.constant 0 : index
      %c0_16 = arith.constant 0 : index
      %19 = vector.load %arg5[%c0_15, %c0_16] : memref<128x128xbf16, #tpu.memory_space<vmem>>, vector<128x128xbf16>
      tpu.vector_store %arg5[%c0_15, %c0_16], %18 {strides = array<i32>} : memref<128x128xbf16, #tpu.memory_space<vmem>>, vector<128x128xbf16>,
    } else {
    }
    return
  }
  func.func @transform_0(%arg0: i32, %arg1: i32) -> (i32, i32) {
    %c0_i32 = arith.constant 0 : i32
    return %arg0, %arg1 : i32, i32
  }
  func.func @transform_1(%arg0: i32, %arg1: i32) -> (i32, i32) {
    %c0_i32 = arith.constant 0 : i32
    %c0_i32_0 = arith.constant 0 : i32
    return %arg1, %c0_i32 : i32, i32
  }
  func.func @transform_2(%arg0: i32, %arg1: i32) -> (i32, i32) {
    %c0_i32 = arith.constant 0 : i32
    %c0_i32_0 = arith.constant 0 : i32
    %c0_i32_1 = arith.constant 0 : i32
    return %c0_i32, %c0_i32_0 : i32, i32
  }
  func.func @transform_3(%arg0: i32, %arg1: i32) -> (i32, i32) {
    %c0_i32 = arith.constant 0 : i32
    %c0_i32_0 = arith.constant 0 : i32
    return %arg0, %c0_i32 : i32, i32
  }
}

module attributes {stable_mosaic.version = 11 : i64} {
  func.func @_mm_bias_act_kernel(%arg0: i32, %arg1: i32, %arg2: memref<128x128xbf16, #tpu.memory_space<vmem>>, %arg3: memref<128x128xbf16, #tpu.memory_space<vmem>>, %arg4: memref<1x128xf32, #tpu.memory_space<vmem>>, %arg5: memref<128x128xf32, #tpu.memory_space<vmem>>, %arg6: memref<128x128xf32, #tpu.memory_space<vmem>>) attributes {dimension_semantics = [#tpu.dimension_semantics<parallel>, #tpu.dimension_semantics<arbitrary>], iteration_bounds = array<i64: 1, 1>, scalar_prefetch = 0 : i64, scratch_operands = 1 : i64, tpu.core_type = #tpu.core_type<tc>, window_params = [{transform_indices = @transform_0, window_bounds = array<i64: 128, 128>}, {transform_indices = @transform_1, window_bounds = array<i64: 128, 128>}, {pipeline_mode = #tpu.pipeline_mode<synchronous>, transform_indices = @transform_2, window_bounds = array<i64: 1, 128>}, {transform_indices = @transform_3, window_bounds = array<i64: 128, 128>}]} {
    %c0_i32 = arith.constant 0 : i32
    %0 = arith.cmpi eq, %arg1, %c0_i32 : i32
    %1 = arith.extui %0 : i1 to i32
    %c0_i32_0 = arith.constant 0 : i32
    %2 = arith.cmpi ne, %1, %c0_i32_0 : i32
    scf.if %2 {
      %cst_10 = arith.constant 0.000000e+00 : f32
      %12 = vector.broadcast %cst_10 : f32 to vector<128x128xf32>
      %c0_11 = arith.constant 0 : index
      %c0_12 = arith.constant 0 : index
      %13 = vector.load %arg6[%c0_11, %c0_12] : memref<128x128xf32, #tpu.memory_space<vmem>>, vector<128x128xf32>
      tpu.vector_store %arg6[%c0_11, %c0_12], %12 {strides = array<i32>} : memref<128x128xf32, #tpu.memory_space<vmem>>, vector<128x128xf32>,
    } else {
    }
    %c0 = arith.constant 0 : index
    %c0_1 = arith.constant 0 : index
    %3 = vector.load %arg6[%c0, %c0_1] : memref<128x128xf32, #tpu.memory_space<vmem>>, vector<128x128xf32>
    %c0_2 = arith.constant 0 : index
    %c0_3 = arith.constant 0 : index
    %4 = vector.load %arg2[%c0_2, %c0_3] : memref<128x128xbf16, #tpu.memory_space<vmem>>, vector<128x128xbf16>
    %c0_4 = arith.constant 0 : index
    %c0_5 = arith.constant 0 : index
    %5 = vector.load %arg3[%c0_4, %c0_5] : memref<128x128xbf16, #tpu.memory_space<vmem>>, vector<128x128xbf16>
    %cst = arith.constant dense<0.000000e+00> : vector<128x128xf32>
    %6 = tpu.matmul %4, %5, %cst {dimension_numbers = #tpu.dot_dimension_numbers<[1], [0], [0], [1], [0, 0, 1, 1], [], []>} : vector<128x128xbf16>, vector<128x128xbf16>, vector<128x128xf32> -> vector<128x128xf32>
    %7 = arith.addf %3, %6 : vector<128x128xf32>
    %c0_6 = arith.constant 0 : index
    %c0_7 = arith.constant 0 : index
    %8 = vector.load %arg6[%c0_6, %c0_7] : memref<128x128xf32, #tpu.memory_space<vmem>>, vector<128x128xf32>
    tpu.vector_store %arg6[%c0_6, %c0_7], %7 {strides = array<i32>} : memref<128x128xf32, #tpu.memory_space<vmem>>, vector<128x128xf32>,
    %c0_i32_8 = arith.constant 0 : i32
    %9 = arith.cmpi eq, %arg1, %c0_i32_8 : i32
    %10 = arith.extui %9 : i1 to i32
    %c0_i32_9 = arith.constant 0 : i32
    %11 = arith.cmpi ne, %10, %c0_i32_9 : i32
    scf.if %11 {
      %c0_10 = arith.constant 0 : index
      %c0_11 = arith.constant 0 : index
      %12 = vector.load %arg6[%c0_10, %c0_11] : memref<128x128xf32, #tpu.memory_space<vmem>>, vector<128x128xf32>
      %c0_12 = arith.constant 0 : index
      %c0_13 = arith.constant 0 : index
      %13 = vector.load %arg4[%c0_12, %c0_13] : memref<1x128xf32, #tpu.memory_space<vmem>>, vector<1x128xf32>
      %14 = vector.broadcast %13 : vector<1x128xf32> to vector<128x128xf32>
      %15 = arith.addf %12, %14 : vector<128x128xf32>
      %c0_14 = arith.constant 0 : index
      %c0_15 = arith.constant 0 : index
      %16 = vector.load %arg5[%c0_14, %c0_15] : memref<128x128xf32, #tpu.memory_space<vmem>>, vector<128x128xf32>
      tpu.vector_store %arg5[%c0_14, %c0_15], %15 {strides = array<i32>} : memref<128x128xf32, #tpu.memory_space<vmem>>, vector<128x128xf32>,
    } else {
    }
    return
  }
  func.func @transform_0(%arg0: i32, %arg1: i32) -> (i32, i32) {
    %c0_i32 = arith.constant 0 : i32
    return %arg0, %arg1 : i32, i32
  }
  func.func @transform_1(%arg0: i32, %arg1: i32) -> (i32, i32) {
    %c0_i32 = arith.constant 0 : i32
    %c0_i32_0 = arith.constant 0 : i32
    return %arg1, %c0_i32 : i32, i32
  }
  func.func @transform_2(%arg0: i32, %arg1: i32) -> (i32, i32) {
    %c0_i32 = arith.constant 0 : i32
    %c0_i32_0 = arith.constant 0 : i32
    %c0_i32_1 = arith.constant 0 : i32
    return %c0_i32, %c0_i32_0 : i32, i32
  }
  func.func @transform_3(%arg0: i32, %arg1: i32) -> (i32, i32) {
    %c0_i32 = arith.constant 0 : i32
    %c0_i32_0 = arith.constant 0 : i32
    return %arg0, %c0_i32 : i32, i32
  }
}

</mosaic_0001>

<llo_original>
// kernel: gcn_forward.4
$region0: #{gcn_forward.4}
  #allocation0 [shape = 'u32[]', space=smem, size = 0x4, offset = 0x4, fixed_abs, tag = 'smem constant byte address 0x4 - core index']
  #allocation1 [shape = 'u32[72,128]{1,0:T(1,128)}', space=vmem, size = 0x9000, scoped, tag = 'internal scratch']
  #allocation2 [shape = 'f32[128,128]{1,0:T(8,128)}', space=vmem, size = 0x10000, scoped, tag = 'scratch operand']
  %s0 = inlined_call_operand.vmem [shape: bf16[128,128], index: 0, kind: input, shape index: {}]
  %s1 = inlined_call_operand.vmem [shape: bf16[128,128], index: 1, kind: input, shape index: {}]
  %s2 = inlined_call_operand.vmem [shape: f32[1,128], index: 2, kind: input, shape index: {}]
  %s3 = inlined_call_operand.vmem [shape: bf16[128,128], index: 3, kind: output, shape index: {}]
  %s4 = sld [smem:[#allocation0]]
  $region30: #{gcn_forward.4} parent=0
    _
  %s6 = ssub.s32 1, %s4
  %s7 = scalar_select 0, %s6, %s4
  // Predicated region
  $region2: #{gcn_forward.4} parent=0 // pred_check
    _
  $region3: #{gcn_forward.4} parent=0 // pred_check_branch
    %9 = sbr.rel (0) target = $region5
  $region4: #{gcn_forward.4} parent=0 // pred_region
    _
  $region5: #{gcn_forward.4} parent=0 // pred_fallthru
    _
  // Predicated region
  $region6: #{gcn_forward.4} parent=0 // pred_check
    _
  $region7: #{gcn_forward.4} parent=0 // pred_check_branch
    %11 = sbr.rel (0) target = $region9
  $region8: #{gcn_forward.4} parent=0 // pred_region
    _
  $region9: #{gcn_forward.4} parent=0 // pred_fallthru
    _
  // Predicated region
  $region10: #{gcn_forward.4} parent=0 // pred_check
    _
  $region11: #{gcn_forward.4} parent=0 // pred_check_branch
    %13 = sbr.rel (0) target = $region13
  $region12: #{gcn_forward.4} parent=0 // pred_region
    _
  $region13: #{gcn_forward.4} parent=0 // pred_fallthru
    _
  %p14 = scmp.eq.s32.totalorder 0, 0
  // Predicated region
  $region14: #{gcn_forward.4} parent=0 // pred_check
    %p15 = pneg %p14
  $region15: #{gcn_forward.4} parent=0 // pred_check_branch
    %17 = sbr.rel (%p15) target = $region17
  $region16: #{gcn_forward.4} parent=0 // pred_region
    %18 = vst [vmem:[#allocation2] sm:$0xff] 0.0
    %19 = vst [vmem:[#allocation2 + $0x8] sm:$0xff] 0.0
    %20 = vst [vmem:[#allocation2 + $0x10] sm:$0xff] 0.0
    %21 = vst [vmem:[#allocation2 + $0x18] sm:$0xff] 0.0
    %22 = vst [vmem:[#allocation2 + $0x20] sm:$0xff] 0.0
    %23 = vst [vmem:[#allocation2 + $0x28] sm:$0xff] 0.0
    %24 = vst [vmem:[#allocation2 + $0x30] sm:$0xff] 0.0
    %25 = vst [vmem:[#allocation2 + $0x38] sm:$0xff] 0.0
    %26 = vst [vmem:[#allocation2 + $0x40] sm:$0xff] 0.0
    %27 = vst [vmem:[#allocation2 + $0x48] sm:$0xff] 0.0
    %28 = vst [vmem:[#allocation2 + $0x50] sm:$0xff] 0.0
    %29 = vst [vmem:[#allocation2 + $0x58] sm:$0xff] 0.0
    %30 = vst [vmem:[#allocation2 + $0x60] sm:$0xff] 0.0
    %31 = vst [vmem:[#allocation2 + $0x68] sm:$0xff] 0.0
    %32 = vst [vmem:[#allocation2 + $0x70] sm:$0xff] 0.0
    %33 = vst [vmem:[#allocation2 + $0x78] sm:$0xff] 0.0
  $region17: #{gcn_forward.4} parent=0 // pred_fallthru
    _
  %v34 = vld [vmem:[#allocation2] sm:$0xff]
  %v35 = vld [vmem:[#allocation2 + $0x8] sm:$0xff]
  %v36 = vld [vmem:[#allocation2 + $0x10] sm:$0xff]
  %v37 = vld [vmem:[#allocation2 + $0x18] sm:$0xff]
  %v38 = vld [vmem:[#allocation2 + $0x20] sm:$0xff]
  %v39 = vld [vmem:[#allocation2 + $0x28] sm:$0xff]
  %v40 = vld [vmem:[#allocation2 + $0x30] sm:$0xff]
  %v41 = vld [vmem:[#allocation2 + $0x38] sm:$0xff]
  %v42 = vld [vmem:[#allocation2 + $0x40] sm:$0xff]
  %v43 = vld [vmem:[#allocation2 + $0x48] sm:$0xff]
  %v44 = vld [vmem:[#allocation2 + $0x50] sm:$0xff]
  %v45 = vld [vmem:[#allocation2 + $0x58] sm:$0xff]
  %v46 = vld [vmem:[#allocation2 + $0x60] sm:$0xff]
  %v47 = vld [vmem:[#allocation2 + $0x68] sm:$0xff]
  %v48 = vld [vmem:[#allocation2 + $0x70] sm:$0xff]
  %v49 = vld [vmem:[#allocation2 + $0x78] sm:$0xff]
  %v50 = vld [vmem:[%s0] sm:$0xf]
  %v51 = vld [vmem:[%s0 + $0x4] sm:$0xf]
  %v52 = vld [vmem:[%s0 + $0x8] sm:$0xf]
  %v53 = vld [vmem:[%s0 + $0xc] sm:$0xf]
  %v54 = vld [vmem:[%s0 + $0x10] sm:$0xf]
  %v55 = vld [vmem:[%s0 + $0x14] sm:$0xf]
  %v56 = vld [vmem:[%s0 + $0x18] sm:$0xf]
  %v57 = vld [vmem:[%s0 + $0x1c] sm:$0xf]
  %v58 = vld [vmem:[%s0 + $0x20] sm:$0xf]
  %v59 = vld [vmem:[%s0 + $0x24] sm:$0xf]
  %v60 = vld [vmem:[%s0 + $0x28] sm:$0xf]
  %v61 = vld [vmem:[%s0 + $0x2c] sm:$0xf]
  %v62 = vld [vmem:[%s0 + $0x30] sm:$0xf]
  %v63 = vld [vmem:[%s0 + $0x34] sm:$0xf]
  %v64 = vld [vmem:[%s0 + $0x38] sm:$0xf]
  %v65 = vld [vmem:[%s0 + $0x3c] sm:$0xf]
  %v66 = vld [vmem:[%s1] sm:$0xf]
  %v67 = vld [vmem:[%s1 + $0x4] sm:$0xf]
  %v68 = vld [vmem:[%s1 + $0x8] sm:$0xf]
  %v69 = vld [vmem:[%s1 + $0xc] sm:$0xf]
  %v70 = vld [vmem:[%s1 + $0x10] sm:$0xf]
  %v71 = vld [vmem:[%s1 + $0x14] sm:$0xf]
  %v72 = vld [vmem:[%s1 + $0x18] sm:$0xf]
  %v73 = vld [vmem:[%s1 + $0x1c] sm:$0xf]
  %v74 = vld [vmem:[%s1 + $0x20] sm:$0xf]
  %v75 = vld [vmem:[%s1 + $0x24] sm:$0xf]
  %v76 = vld [vmem:[%s1 + $0x28] sm:$0xf]
  %v77 = vld [vmem:[%s1 + $0x2c] sm:$0xf]
  %v78 = vld [vmem:[%s1 + $0x30] sm:$0xf]
  %v79 = vld [vmem:[%s1 + $0x34] sm:$0xf]
  %v80 = vld [vmem:[%s1 + $0x38] sm:$0xf]
  %v81 = vld [vmem:[%s1 + $0x3c] sm:$0xf]
  %v98 = vunpack.c.l.b16 %v50
  %v99 = vunpack.c.l.b16 %v51
  %v100 = vunpack.c.l.b16 %v52
  %v101 = vunpack.c.l.b16 %v53
  %v102 = vunpack.c.l.b16 %v54
  %v103 = vunpack.c.l.b16 %v55
  %v104 = vunpack.c.l.b16 %v56
  %v105 = vunpack.c.l.b16 %v57
  %v106 = vunpack.c.l.b16 %v58
  %v107 = vunpack.c.l.b16 %v59
  %v108 = vunpack.c.l.b16 %v60
  %v109 = vunpack.c.l.b16 %v61
  %v110 = vunpack.c.l.b16 %v62
  %v111 = vunpack.c.l.b16 %v63
  %v112 = vunpack.c.l.b16 %v64
  %v113 = vunpack.c.l.b16 %v65
  %v114 = vpack.c.b16 %v99, %v98
  %v115 = vpack.c.b16 %v101, %v100
  %v116 = vpack.c.b16 %v103, %v102
  %v117 = vpack.c.b16 %v105, %v104
  %v118 = vpack.c.b16 %v107, %v106
  %v119 = vpack.c.b16 %v109, %v108
  %v120 = vpack.c.b16 %v111, %v110
  %v121 = vpack.c.b16 %v113, %v112
  %v146 = vunpack.c.l.b16 %v66
  %v147 = vunpack.c.l.b16 %v67
  %v148 = vunpack.c.l.b16 %v68
  %v149 = vunpack.c.l.b16 %v69
  %v150 = vunpack.c.l.b16 %v70
  %v151 = vunpack.c.l.b16 %v71
  %v152 = vunpack.c.l.b16 %v72
  %v153 = vunpack.c.l.b16 %v73
  %v154 = vunpack.c.l.b16 %v74
  %v155 = vunpack.c.l.b16 %v75
  %v156 = vunpack.c.l.b16 %v76
  %v157 = vunpack.c.l.b16 %v77
  %v158 = vunpack.c.l.b16 %v78
  %v159 = vunpack.c.l.b16 %v79
  %v160 = vunpack.c.l.b16 %v80
  %v161 = vunpack.c.l.b16 %v81
  %v162 = vpack.c.b16 %v147, %v146
  %v163 = vpack.c.b16 %v149, %v148
  %v164 = vpack.c.b16 %v151, %v150
  %v165 = vpack.c.b16 %v153, %v152
  %v166 = vpack.c.b16 %v155, %v154
  %v167 = vpack.c.b16 %v157, %v156
  %v168 = vpack.c.b16 %v159, %v158
  %v169 = vpack.c.b16 %v161, %v160
  %178 = vmatpush.bf16.msra.mxu0 %v169
  %179 = vmatpush.bf16.msra.mxu0 %v168
  %180 = vmatpush.bf16.msra.mxu0 %v167
  %181 = vmatpush.bf16.msra.mxu0 %v166
  %182 = vmatpush.bf16.msra.mxu0 %v165
  %183 = vmatpush.bf16.msra.mxu0 %v164
  %184 = vmatpush.bf16.msra.mxu0 %v163
  %185 = vmatpush.bf16.msra.mxu0 %v162
  %186 = vmatmul.bf16.gmra.mxu0 %v114
  %v187 = vpop.f32.mrf.mxu0
  %v188 = vadd.f32 0.0, %v187
  %v189 = vpop.f32.mrf.mxu0
  %v190 = vadd.f32 0.0, %v189
  %191 = vmatmul.bf16.gmra.mxu0 %v115
  %v192 = vpop.f32.mrf.mxu0
  %v193 = vadd.f32 0.0, %v192
  %v194 = vpop.f32.mrf.mxu0
  %v195 = vadd.f32 0.0, %v194
  %196 = vmatmul.bf16.gmra.mxu0 %v116
  %v197 = vpop.f32.mrf.mxu0
  %v198 = vadd.f32 0.0, %v197
  %v199 = vpop.f32.mrf.mxu0
  %v200 = vadd.f32 0.0, %v199
  %201 = vmatmul.bf16.gmra.mxu0 %v117
  %v202 = vpop.f32.mrf.mxu0
  %v203 = vadd.f32 0.0, %v202
  %v204 = vpop.f32.mrf.mxu0
  %v205 = vadd.f32 0.0, %v204
  %206 = vmatmul.bf16.gmra.mxu0 %v118
  %v207 = vpop.f32.mrf.mxu0
  %v208 = vadd.f32 0.0, %v207
  %v209 = vpop.f32.mrf.mxu0
  %v210 = vadd.f32 0.0, %v209
  %211 = vmatmul.bf16.gmra.mxu0 %v119
  %v212 = vpop.f32.mrf.mxu0
  %v213 = vadd.f32 0.0, %v212
  %v214 = vpop.f32.mrf.mxu0
  %v215 = vadd.f32 0.0, %v214
  %216 = vmatmul.bf16.gmra.mxu0 %v120
  %v217 = vpop.f32.mrf.mxu0
  %v218 = vadd.f32 0.0, %v217
  %v219 = vpop.f32.mrf.mxu0
  %v220 = vadd.f32 0.0, %v219
  %221 = vmatmul.bf16.gmra.mxu0 %v121
  %v222 = vpop.f32.mrf.mxu0
  %v223 = vadd.f32 0.0, %v222
  %v224 = vpop.f32.mrf.mxu0
  %v225 = vadd.f32 0.0, %v224
  %226 = vdwg.mxu0
  %v227 = vadd.f32 %v34, %v188
  %v228 = vadd.f32 %v35, %v190
  %v229 = vadd.f32 %v36, %v193
  %v230 = vadd.f32 %v37, %v195
  %v231 = vadd.f32 %v38, %v198
  %v232 = vadd.f32 %v39, %v200
  %v233 = vadd.f32 %v40, %v203
  %v234 = vadd.f32 %v41, %v205
  %v235 = vadd.f32 %v42, %v208
  %v236 = vadd.f32 %v43, %v210
  %v237 = vadd.f32 %v44, %v213
  %v238 = vadd.f32 %v45, %v215
  %v239 = vadd.f32 %v46, %v218
  %v240 = vadd.f32 %v47, %v220
  %v241 = vadd.f32 %v48, %v223
  %v242 = vadd.f32 %v49, %v225
  %243 = vst [vmem:[#allocation2] sm:$0xff] %v227
  %244 = vst [vmem:[#allocation2 + $0x8] sm:$0xff] %v228
  %245 = vst [vmem:[#allocation2 + $0x10] sm:$0xff] %v229
  %246 = vst [vmem:[#allocation2 + $0x18] sm:$0xff] %v230
  %247 = vst [vmem:[#allocation2 + $0x20] sm:$0xff] %v231
  %248 = vst [vmem:[#allocation2 + $0x28] sm:$0xff] %v232
  %249 = vst [vmem:[#allocation2 + $0x30] sm:$0xff] %v233
  %250 = vst [vmem:[#allocation2 + $0x38] sm:$0xff] %v234
  %251 = vst [vmem:[#allocation2 + $0x40] sm:$0xff] %v235
  %252 = vst [vmem:[#allocation2 + $0x48] sm:$0xff] %v236
  %253 = vst [vmem:[#allocation2 + $0x50] sm:$0xff] %v237
  %254 = vst [vmem:[#allocation2 + $0x58] sm:$0xff] %v238
  %255 = vst [vmem:[#allocation2 + $0x60] sm:$0xff] %v239
  %256 = vst [vmem:[#allocation2 + $0x68] sm:$0xff] %v240
  %257 = vst [vmem:[#allocation2 + $0x70] sm:$0xff] %v241
  %258 = vst [vmem:[#allocation2 + $0x78] sm:$0xff] %v242
  // Predicated region
  $region18: #{gcn_forward.4} parent=0 // pred_check
    %p259 = pneg %p14
  $region19: #{gcn_forward.4} parent=0 // pred_check_branch
    %261 = sbr.rel (%p259) target = $region21
  $region20: #{gcn_forward.4} parent=0 // pred_region
    %v262 = vld [vmem:[#allocation2] sm:$0xff]
    %v263 = vld [vmem:[#allocation2 + $0x8] sm:$0xff]
    %v264 = vld [vmem:[#allocation2 + $0x10] sm:$0xff]
    %v265 = vld [vmem:[#allocation2 + $0x18] sm:$0xff]
    %v266 = vld [vmem:[#allocation2 + $0x20] sm:$0xff]
    %v267 = vld [vmem:[#allocation2 + $0x28] sm:$0xff]
    %v268 = vld [vmem:[#allocation2 + $0x30] sm:$0xff]
    %v269 = vld [vmem:[#allocation2 + $0x38] sm:$0xff]
    %v270 = vld [vmem:[#allocation2 + $0x40] sm:$0xff]
    %v271 = vld [vmem:[#allocation2 + $0x48] sm:$0xff]
    %v272 = vld [vmem:[#allocation2 + $0x50] sm:$0xff]
    %v273 = vld [vmem:[#allocation2 + $0x58] sm:$0xff]
    %v274 = vld [vmem:[#allocation2 + $0x60] sm:$0xff]
    %v275 = vld [vmem:[#allocation2 + $0x68] sm:$0xff]
    %v276 = vld [vmem:[#allocation2 + $0x70] sm:$0xff]
    %v277 = vld [vmem:[#allocation2 + $0x78] sm:$0xff]
    %v278 = vpack.c.bf16 %v262, %v262
    %v279 = vpack.c.bf16 %v263, %v263
    %v280 = vpack.c.bf16 %v264, %v264
    %v281 = vpack.c.bf16 %v265, %v265
    %v282 = vpack.c.bf16 %v266, %v266
    %v283 = vpack.c.bf16 %v267, %v267
    %v284 = vpack.c.bf16 %v268, %v268
    %v285 = vpack.c.bf16 %v269, %v269
    %v286 = vpack.c.bf16 %v270, %v270
    %v287 = vpack.c.bf16 %v271, %v271
    %v288 = vpack.c.bf16 %v272, %v272
    %v289 = vpack.c.bf16 %v273, %v273
    %v290 = vpack.c.bf16 %v274, %v274
    %v291 = vpack.c.bf16 %v275, %v275
    %v292 = vpack.c.bf16 %v276, %v276
    %v293 = vpack.c.bf16 %v277, %v277
    %294 = vst [vmem:[%s3] sm:$0xf] %v278
    %295 = vst [vmem:[%s3 + $0x4] sm:$0xf] %v279
    %296 = vst [vmem:[%s3 + $0x8] sm:$0xf] %v280
    %297 = vst [vmem:[%s3 + $0xc] sm:$0xf] %v281
    %298 = vst [vmem:[%s3 + $0x10] sm:$0xf] %v282
    %299 = vst [vmem:[%s3 + $0x14] sm:$0xf] %v283
    %300 = vst [vmem:[%s3 + $0x18] sm:$0xf] %v284
    %301 = vst [vmem:[%s3 + $0x1c] sm:$0xf] %v285
    %302 = vst [vmem:[%s3 + $0x20] sm:$0xf] %v286
    %303 = vst [vmem:[%s3 + $0x24] sm:$0xf] %v287
    %304 = vst [vmem:[%s3 + $0x28] sm:$0xf] %v288
    %305 = vst [vmem:[%s3 + $0x2c] sm:$0xf] %v289
    %306 = vst [vmem:[%s3 + $0x30] sm:$0xf] %v290
    %307 = vst [vmem:[%s3 + $0x34] sm:$0xf] %v291
    %308 = vst [vmem:[%s3 + $0x38] sm:$0xf] %v292
    %309 = vst [vmem:[%s3 + $0x3c] sm:$0xf] %v293
  $region21: #{gcn_forward.4} parent=0 // pred_fallthru
    _
  // Predicated region
  $region22: #{gcn_forward.4} parent=0 // pred_check
    _
  $region23: #{gcn_forward.4} parent=0 // pred_check_branch
    %311 = sbr.rel (0) target = $region25
  $region24: #{gcn_forward.4} parent=0 // pred_region
    _
  $region25: #{gcn_forward.4} parent=0 // pred_fallthru
    _
  // Predicated region
  $region26: #{gcn_forward.4} parent=0 // pred_check
    _
  $region27: #{gcn_forward.4} parent=0 // pred_check_branch
    %313 = sbr.rel (0) target = $region29
  $region28: #{gcn_forward.4} parent=0 // pred_region
    _
  $region29: #{gcn_forward.4} parent=0 // pred_fallthru
    _

// kernel: gcn_forward.5
$region0: #{gcn_forward.5}
  #allocation0 [shape = 'u32[]', space=smem, size = 0x4, offset = 0x4, fixed_abs, tag = 'smem constant byte address 0x4 - core index']
  #allocation1 [shape = 'u32[72,128]{1,0:T(1,128)}', space=vmem, size = 0x9000, scoped, tag = 'internal scratch']
  #allocation2 [shape = 'f32[128,128]{1,0:T(8,128)}', space=vmem, size = 0x10000, scoped, tag = 'scratch operand']
  %s0 = inlined_call_operand.vmem [shape: bf16[128,128], index: 0, kind: input, shape index: {}]
  %s1 = inlined_call_operand.vmem [shape: bf16[128,128], index: 1, kind: input, shape index: {}]
  %s2 = inlined_call_operand.vmem [shape: f32[1,128], index: 2, kind: input, shape index: {}]
  %s3 = inlined_call_operand.vmem [shape: bf16[128,128], index: 3, kind: output, shape index: {}]
  %s4 = sld [smem:[#allocation0]]
  $region30: #{gcn_forward.5} parent=0
    _
  %s6 = ssub.s32 1, %s4
  %s7 = scalar_select 0, %s6, %s4
  // Predicated region
  $region2: #{gcn_forward.5} parent=0 // pred_check
    _
  $region3: #{gcn_forward.5} parent=0 // pred_check_branch
    %9 = sbr.rel (0) target = $region5
  $region4: #{gcn_forward.5} parent=0 // pred_region
    _
  $region5: #{gcn_forward.5} parent=0 // pred_fallthru
    _
  // Predicated region
  $region6: #{gcn_forward.5} parent=0 // pred_check
    _
  $region7: #{gcn_forward.5} parent=0 // pred_check_branch
    %11 = sbr.rel (0) target = $region9
  $region8: #{gcn_forward.5} parent=0 // pred_region
    _
  $region9: #{gcn_forward.5} parent=0 // pred_fallthru
    _
  // Predicated region
  $region10: #{gcn_forward.5} parent=0 // pred_check
    _
  $region11: #{gcn_forward.5} parent=0 // pred_check_branch
    %13 = sbr.rel (0) target = $region13
  $region12: #{gcn_forward.5} parent=0 // pred_region
    _
  $region13: #{gcn_forward.5} parent=0 // pred_fallthru
    _
  %p14 = scmp.eq.s32.totalorder 0, 0
  // Predicated region
  $region14: #{gcn_forward.5} parent=0 // pred_check
    %p15 = pneg %p14
  $region15: #{gcn_forward.5} parent=0 // pred_check_branch
    %17 = sbr.rel (%p15) target = $region17
  $region16: #{gcn_forward.5} parent=0 // pred_region
    %18 = vst [vmem:[#allocation2] sm:$0xff] 0.0
    %19 = vst [vmem:[#allocation2 + $0x8] sm:$0xff] 0.0
    %20 = vst [vmem:[#allocation2 + $0x10] sm:$0xff] 0.0
    %21 = vst [vmem:[#allocation2 + $0x18] sm:$0xff] 0.0
    %22 = vst [vmem:[#allocation2 + $0x20] sm:$0xff] 0.0
    %23 = vst [vmem:[#allocation2 + $0x28] sm:$0xff] 0.0
    %24 = vst [vmem:[#allocation2 + $0x30] sm:$0xff] 0.0
    %25 = vst [vmem:[#allocation2 + $0x38] sm:$0xff] 0.0
    %26 = vst [vmem:[#allocation2 + $0x40] sm:$0xff] 0.0
    %27 = vst [vmem:[#allocation2 + $0x48] sm:$0xff] 0.0
    %28 = vst [vmem:[#allocation2 + $0x50] sm:$0xff] 0.0
    %29 = vst [vmem:[#allocation2 + $0x58] sm:$0xff] 0.0
    %30 = vst [vmem:[#allocation2 + $0x60] sm:$0xff] 0.0
    %31 = vst [vmem:[#allocation2 + $0x68] sm:$0xff] 0.0
    %32 = vst [vmem:[#allocation2 + $0x70] sm:$0xff] 0.0
    %33 = vst [vmem:[#allocation2 + $0x78] sm:$0xff] 0.0
  $region17: #{gcn_forward.5} parent=0 // pred_fallthru
    _
  %v34 = vld [vmem:[#allocation2] sm:$0xff]
  %v35 = vld [vmem:[#allocation2 + $0x8] sm:$0xff]
  %v36 = vld [vmem:[#allocation2 + $0x10] sm:$0xff]
  %v37 = vld [vmem:[#allocation2 + $0x18] sm:$0xff]
  %v38 = vld [vmem:[#allocation2 + $0x20] sm:$0xff]
  %v39 = vld [vmem:[#allocation2 + $0x28] sm:$0xff]
  %v40 = vld [vmem:[#allocation2 + $0x30] sm:$0xff]
  %v41 = vld [vmem:[#allocation2 + $0x38] sm:$0xff]
  %v42 = vld [vmem:[#allocation2 + $0x40] sm:$0xff]
  %v43 = vld [vmem:[#allocation2 + $0x48] sm:$0xff]
  %v44 = vld [vmem:[#allocation2 + $0x50] sm:$0xff]
  %v45 = vld [vmem:[#allocation2 + $0x58] sm:$0xff]
  %v46 = vld [vmem:[#allocation2 + $0x60] sm:$0xff]
  %v47 = vld [vmem:[#allocation2 + $0x68] sm:$0xff]
  %v48 = vld [vmem:[#allocation2 + $0x70] sm:$0xff]
  %v49 = vld [vmem:[#allocation2 + $0x78] sm:$0xff]
  %v50 = vld [vmem:[%s0] sm:$0xf]
  %v51 = vld [vmem:[%s0 + $0x4] sm:$0xf]
  %v52 = vld [vmem:[%s0 + $0x8] sm:$0xf]
  %v53 = vld [vmem:[%s0 + $0xc] sm:$0xf]
  %v54 = vld [vmem:[%s0 + $0x10] sm:$0xf]
  %v55 = vld [vmem:[%s0 + $0x14] sm:$0xf]
  %v56 = vld [vmem:[%s0 + $0x18] sm:$0xf]
  %v57 = vld [vmem:[%s0 + $0x1c] sm:$0xf]
  %v58 = vld [vmem:[%s0 + $0x20] sm:$0xf]
  %v59 = vld [vmem:[%s0 + $0x24] sm:$0xf]
  %v60 = vld [vmem:[%s0 + $0x28] sm:$0xf]
  %v61 = vld [vmem:[%s0 + $0x2c] sm:$0xf]
  %v62 = vld [vmem:[%s0 + $0x30] sm:$0xf]
  %v63 = vld [vmem:[%s0 + $0x34] sm:$0xf]
  %v64 = vld [vmem:[%s0 + $0x38] sm:$0xf]
  %v65 = vld [vmem:[%s0 + $0x3c] sm:$0xf]
  %v66 = vld [vmem:[%s1] sm:$0xf]
  %v67 = vld [vmem:[%s1 + $0x4] sm:$0xf]
  %v68 = vld [vmem:[%s1 + $0x8] sm:$0xf]
  %v69 = vld [vmem:[%s1 + $0xc] sm:$0xf]
  %v70 = vld [vmem:[%s1 + $0x10] sm:$0xf]
  %v71 = vld [vmem:[%s1 + $0x14] sm:$0xf]
  %v72 = vld [vmem:[%s1 + $0x18] sm:$0xf]
  %v73 = vld [vmem:[%s1 + $0x1c] sm:$0xf]
  %v74 = vld [vmem:[%s1 + $0x20] sm:$0xf]
  %v75 = vld [vmem:[%s1 + $0x24] sm:$0xf]
  %v76 = vld [vmem:[%s1 + $0x28] sm:$0xf]
  %v77 = vld [vmem:[%s1 + $0x2c] sm:$0xf]
  %v78 = vld [vmem:[%s1 + $0x30] sm:$0xf]
  %v79 = vld [vmem:[%s1 + $0x34] sm:$0xf]
  %v80 = vld [vmem:[%s1 + $0x38] sm:$0xf]
  %v81 = vld [vmem:[%s1 + $0x3c] sm:$0xf]
  %v98 = vunpack.c.l.b16 %v50
  %v99 = vunpack.c.l.b16 %v51
  %v100 = vunpack.c.l.b16 %v52
  %v101 = vunpack.c.l.b16 %v53
  %v102 = vunpack.c.l.b16 %v54
  %v103 = vunpack.c.l.b16 %v55
  %v104 = vunpack.c.l.b16 %v56
  %v105 = vunpack.c.l.b16 %v57
  %v106 = vunpack.c.l.b16 %v58
  %v107 = vunpack.c.l.b16 %v59
  %v108 = vunpack.c.l.b16 %v60
  %v109 = vunpack.c.l.b16 %v61
  %v110 = vunpack.c.l.b16 %v62
  %v111 = vunpack.c.l.b16 %v63
  %v112 = vunpack.c.l.b16 %v64
  %v113 = vunpack.c.l.b16 %v65
  %v114 = vpack.c.b16 %v99, %v98
  %v115 = vpack.c.b16 %v101, %v100
  %v116 = vpack.c.b16 %v103, %v102
  %v117 = vpack.c.b16 %v105, %v104
  %v118 = vpack.c.b16 %v107, %v106
  %v119 = vpack.c.b16 %v109, %v108
  %v120 = vpack.c.b16 %v111, %v110
  %v121 = vpack.c.b16 %v113, %v112
  %v146 = vunpack.c.l.b16 %v66
  %v147 = vunpack.c.l.b16 %v67
  %v148 = vunpack.c.l.b16 %v68
  %v149 = vunpack.c.l.b16 %v69
  %v150 = vunpack.c.l.b16 %v70
  %v151 = vunpack.c.l.b16 %v71
  %v152 = vunpack.c.l.b16 %v72
  %v153 = vunpack.c.l.b16 %v73
  %v154 = vunpack.c.l.b16 %v74
  %v155 = vunpack.c.l.b16 %v75
  %v156 = vunpack.c.l.b16 %v76
  %v157 = vunpack.c.l.b16 %v77
  %v158 = vunpack.c.l.b16 %v78
  %v159 = vunpack.c.l.b16 %v79
  %v160 = vunpack.c.l.b16 %v80
  %v161 = vunpack.c.l.b16 %v81
  %v162 = vpack.c.b16 %v147, %v146
  %v163 = vpack.c.b16 %v149, %v148
  %v164 = vpack.c.b16 %v151, %v150
  %v165 = vpack.c.b16 %v153, %v152
  %v166 = vpack.c.b16 %v155, %v154
  %v167 = vpack.c.b16 %v157, %v156
  %v168 = vpack.c.b16 %v159, %v158
  %v169 = vpack.c.b16 %v161, %v160
  %178 = vmatpush.bf16.msra.mxu0 %v169
  %179 = vmatpush.bf16.msra.mxu0 %v168
  %180 = vmatpush.bf16.msra.mxu0 %v167
  %181 = vmatpush.bf16.msra.mxu0 %v166
  %182 = vmatpush.bf16.msra.mxu0 %v165
  %183 = vmatpush.bf16.msra.mxu0 %v164
  %184 = vmatpush.bf16.msra.mxu0 %v163
  %185 = vmatpush.bf16.msra.mxu0 %v162
  %186 = vmatmul.bf16.gmra.mxu0 %v114
  %v187 = vpop.f32.mrf.mxu0
  %v188 = vadd.f32 0.0, %v187
  %v189 = vpop.f32.mrf.mxu0
  %v190 = vadd.f32 0.0, %v189
  %191 = vmatmul.bf16.gmra.mxu0 %v115
  %v192 = vpop.f32.mrf.mxu0
  %v193 = vadd.f32 0.0, %v192
  %v194 = vpop.f32.mrf.mxu0
  %v195 = vadd.f32 0.0, %v194
  %196 = vmatmul.bf16.gmra.mxu0 %v116
  %v197 = vpop.f32.mrf.mxu0
  %v198 = vadd.f32 0.0, %v197
  %v199 = vpop.f32.mrf.mxu0
  %v200 = vadd.f32 0.0, %v199
  %201 = vmatmul.bf16.gmra.mxu0 %v117
  %v202 = vpop.f32.mrf.mxu0
  %v203 = vadd.f32 0.0, %v202
  %v204 = vpop.f32.mrf.mxu0
  %v205 = vadd.f32 0.0, %v204
  %206 = vmatmul.bf16.gmra.mxu0 %v118
  %v207 = vpop.f32.mrf.mxu0
  %v208 = vadd.f32 0.0, %v207
  %v209 = vpop.f32.mrf.mxu0
  %v210 = vadd.f32 0.0, %v209
  %211 = vmatmul.bf16.gmra.mxu0 %v119
  %v212 = vpop.f32.mrf.mxu0
  %v213 = vadd.f32 0.0, %v212
  %v214 = vpop.f32.mrf.mxu0
  %v215 = vadd.f32 0.0, %v214
  %216 = vmatmul.bf16.gmra.mxu0 %v120
  %v217 = vpop.f32.mrf.mxu0
  %v218 = vadd.f32 0.0, %v217
  %v219 = vpop.f32.mrf.mxu0
  %v220 = vadd.f32 0.0, %v219
  %221 = vmatmul.bf16.gmra.mxu0 %v121
  %v222 = vpop.f32.mrf.mxu0
  %v223 = vadd.f32 0.0, %v222
  %v224 = vpop.f32.mrf.mxu0
  %v225 = vadd.f32 0.0, %v224
  %226 = vdwg.mxu0
  %v227 = vadd.f32 %v34, %v188
  %v228 = vadd.f32 %v35, %v190
  %v229 = vadd.f32 %v36, %v193
  %v230 = vadd.f32 %v37, %v195
  %v231 = vadd.f32 %v38, %v198
  %v232 = vadd.f32 %v39, %v200
  %v233 = vadd.f32 %v40, %v203
  %v234 = vadd.f32 %v41, %v205
  %v235 = vadd.f32 %v42, %v208
  %v236 = vadd.f32 %v43, %v210
  %v237 = vadd.f32 %v44, %v213
  %v238 = vadd.f32 %v45, %v215
  %v239 = vadd.f32 %v46, %v218
  %v240 = vadd.f32 %v47, %v220
  %v241 = vadd.f32 %v48, %v223
  %v242 = vadd.f32 %v49, %v225
  %243 = vst [vmem:[#allocation2] sm:$0xff] %v227
  %244 = vst [vmem:[#allocation2 + $0x8] sm:$0xff] %v228
  %245 = vst [vmem:[#allocation2 + $0x10] sm:$0xff] %v229
  %246 = vst [vmem:[#allocation2 + $0x18] sm:$0xff] %v230
  %247 = vst [vmem:[#allocation2 + $0x20] sm:$0xff] %v231
  %248 = vst [vmem:[#allocation2 + $0x28] sm:$0xff] %v232
  %249 = vst [vmem:[#allocation2 + $0x30] sm:$0xff] %v233
  %250 = vst [vmem:[#allocation2 + $0x38] sm:$0xff] %v234
  %251 = vst [vmem:[#allocation2 + $0x40] sm:$0xff] %v235
  %252 = vst [vmem:[#allocation2 + $0x48] sm:$0xff] %v236
  %253 = vst [vmem:[#allocation2 + $0x50] sm:$0xff] %v237
  %254 = vst [vmem:[#allocation2 + $0x58] sm:$0xff] %v238
  %255 = vst [vmem:[#allocation2 + $0x60] sm:$0xff] %v239
  %256 = vst [vmem:[#allocation2 + $0x68] sm:$0xff] %v240
  %257 = vst [vmem:[#allocation2 + $0x70] sm:$0xff] %v241
  %258 = vst [vmem:[#allocation2 + $0x78] sm:$0xff] %v242
  // Predicated region
  $region18: #{gcn_forward.5} parent=0 // pred_check
    %p259 = pneg %p14
  $region19: #{gcn_forward.5} parent=0 // pred_check_branch
    %261 = sbr.rel (%p259) target = $region21
  $region20: #{gcn_forward.5} parent=0 // pred_region
    %v262 = vld [vmem:[#allocation2] sm:$0xff]
    %v263 = vld [vmem:[#allocation2 + $0x8] sm:$0xff]
    %v264 = vld [vmem:[#allocation2 + $0x10] sm:$0xff]
    %v265 = vld [vmem:[#allocation2 + $0x18] sm:$0xff]
    %v266 = vld [vmem:[#allocation2 + $0x20] sm:$0xff]
    %v267 = vld [vmem:[#allocation2 + $0x28] sm:$0xff]
    %v268 = vld [vmem:[#allocation2 + $0x30] sm:$0xff]
    %v269 = vld [vmem:[#allocation2 + $0x38] sm:$0xff]
    %v270 = vld [vmem:[#allocation2 + $0x40] sm:$0xff]
    %v271 = vld [vmem:[#allocation2 + $0x48] sm:$0xff]
    %v272 = vld [vmem:[#allocation2 + $0x50] sm:$0xff]
    %v273 = vld [vmem:[#allocation2 + $0x58] sm:$0xff]
    %v274 = vld [vmem:[#allocation2 + $0x60] sm:$0xff]
    %v275 = vld [vmem:[#allocation2 + $0x68] sm:$0xff]
    %v276 = vld [vmem:[#allocation2 + $0x70] sm:$0xff]
    %v277 = vld [vmem:[#allocation2 + $0x78] sm:$0xff]
    %v278 = vld [vmem:[%s2] sm:$0x1]
    %v280 = vperm.slane %v278, 0
    %v282 = vadd.f32 %v262, %v280
    %v283 = vadd.f32 %v263, %v280
    %v284 = vadd.f32 %v264, %v280
    %v285 = vadd.f32 %v265, %v280
    %v286 = vadd.f32 %v266, %v280
    %v287 = vadd.f32 %v267, %v280
    %v288 = vadd.f32 %v268, %v280
    %v289 = vadd.f32 %v269, %v280
    %v290 = vadd.f32 %v270, %v280
    %v291 = vadd.f32 %v271, %v280
    %v292 = vadd.f32 %v272, %v280
    %v293 = vadd.f32 %v273, %v280
    %v294 = vadd.f32 %v274, %v280
    %v295 = vadd.f32 %v275, %v280
    %v296 = vadd.f32 %v276, %v280
    %v297 = vadd.f32 %v277, %v280
    %v298 = vmax.f32 %v282, 0.0
    %v299 = vmax.f32 %v283, 0.0
    %v300 = vmax.f32 %v284, 0.0
    %v301 = vmax.f32 %v285, 0.0
    %v302 = vmax.f32 %v286, 0.0
    %v303 = vmax.f32 %v287, 0.0
    %v304 = vmax.f32 %v288, 0.0
    %v305 = vmax.f32 %v289, 0.0
    %v306 = vmax.f32 %v290, 0.0
    %v307 = vmax.f32 %v291, 0.0
    %v308 = vmax.f32 %v292, 0.0
    %v309 = vmax.f32 %v293, 0.0
    %v310 = vmax.f32 %v294, 0.0
    %v311 = vmax.f32 %v295, 0.0
    %v312 = vmax.f32 %v296, 0.0
    %v313 = vmax.f32 %v297, 0.0
    %v314 = vpack.c.bf16 %v298, %v298
    %v315 = vpack.c.bf16 %v299, %v299
    %v316 = vpack.c.bf16 %v300, %v300
    %v317 = vpack.c.bf16 %v301, %v301
    %v318 = vpack.c.bf16 %v302, %v302
    %v319 = vpack.c.bf16 %v303, %v303
    %v320 = vpack.c.bf16 %v304, %v304
    %v321 = vpack.c.bf16 %v305, %v305
    %v322 = vpack.c.bf16 %v306, %v306
    %v323 = vpack.c.bf16 %v307, %v307
    %v324 = vpack.c.bf16 %v308, %v308
    %v325 = vpack.c.bf16 %v309, %v309
    %v326 = vpack.c.bf16 %v310, %v310
    %v327 = vpack.c.bf16 %v311, %v311
    %v328 = vpack.c.bf16 %v312, %v312
    %v329 = vpack.c.bf16 %v313, %v313
    %330 = vst [vmem:[%s3] sm:$0xf] %v314
    %331 = vst [vmem:[%s3 + $0x4] sm:$0xf] %v315
    %332 = vst [vmem:[%s3 + $0x8] sm:$0xf] %v316
    %333 = vst [vmem:[%s3 + $0xc] sm:$0xf] %v317
    %334 = vst [vmem:[%s3 + $0x10] sm:$0xf] %v318
    %335 = vst [vmem:[%s3 + $0x14] sm:$0xf] %v319
    %336 = vst [vmem:[%s3 + $0x18] sm:$0xf] %v320
    %337 = vst [vmem:[%s3 + $0x1c] sm:$0xf] %v321
    %338 = vst [vmem:[%s3 + $0x20] sm:$0xf] %v322
    %339 = vst [vmem:[%s3 + $0x24] sm:$0xf] %v323
    %340 = vst [vmem:[%s3 + $0x28] sm:$0xf] %v324
    %341 = vst [vmem:[%s3 + $0x2c] sm:$0xf] %v325
    %342 = vst [vmem:[%s3 + $0x30] sm:$0xf] %v326
    %343 = vst [vmem:[%s3 + $0x34] sm:$0xf] %v327
    %344 = vst [vmem:[%s3 + $0x38] sm:$0xf] %v328
    %345 = vst [vmem:[%s3 + $0x3c] sm:$0xf] %v329
  $region21: #{gcn_forward.5} parent=0 // pred_fallthru
    _
  // Predicated region
  $region22: #{gcn_forward.5} parent=0 // pred_check
    _
  $region23: #{gcn_forward.5} parent=0 // pred_check_branch
    %347 = sbr.rel (0) target = $region25
  $region24: #{gcn_forward.5} parent=0 // pred_region
    _
  $region25: #{gcn_forward.5} parent=0 // pred_fallthru
    _
  // Predicated region
  $region26: #{gcn_forward.5} parent=0 // pred_check
    _
  $region27: #{gcn_forward.5} parent=0 // pred_check_branch
    %349 = sbr.rel (0) target = $region29
  $region28: #{gcn_forward.5} parent=0 // pred_region
    _
  $region29: #{gcn_forward.5} parent=0 // pred_fallthru
    _

// kernel: gcn_forward.7
$region0: #{gcn_forward.7}
  #allocation0 [shape = 'u32[]', space=smem, size = 0x4, offset = 0x4, fixed_abs, tag = 'smem constant byte address 0x4 - core index']
  #allocation1 [shape = 'u32[72,128]{1,0:T(1,128)}', space=vmem, size = 0x9000, scoped, tag = 'internal scratch']
  #allocation2 [shape = 'f32[128,128]{1,0:T(8,128)}', space=vmem, size = 0x10000, scoped, tag = 'scratch operand']
  %s0 = inlined_call_operand.vmem [shape: bf16[128,128], index: 0, kind: input, shape index: {}]
  %s1 = inlined_call_operand.vmem [shape: bf16[128,128], index: 1, kind: input, shape index: {}]
  %s2 = inlined_call_operand.vmem [shape: f32[1,128], index: 2, kind: input, shape index: {}]
  %s3 = inlined_call_operand.vmem [shape: f32[128,128], index: 3, kind: output, shape index: {}]
  %s4 = sld [smem:[#allocation0]]
  $region30: #{gcn_forward.7} parent=0
    _
  %s6 = ssub.s32 1, %s4
  %s7 = scalar_select 0, %s6, %s4
  // Predicated region
  $region2: #{gcn_forward.7} parent=0 // pred_check
    _
  $region3: #{gcn_forward.7} parent=0 // pred_check_branch
    %9 = sbr.rel (0) target = $region5
  $region4: #{gcn_forward.7} parent=0 // pred_region
    _
  $region5: #{gcn_forward.7} parent=0 // pred_fallthru
    _
  // Predicated region
  $region6: #{gcn_forward.7} parent=0 // pred_check
    _
  $region7: #{gcn_forward.7} parent=0 // pred_check_branch
    %11 = sbr.rel (0) target = $region9
  $region8: #{gcn_forward.7} parent=0 // pred_region
    _
  $region9: #{gcn_forward.7} parent=0 // pred_fallthru
    _
  // Predicated region
  $region10: #{gcn_forward.7} parent=0 // pred_check
    _
  $region11: #{gcn_forward.7} parent=0 // pred_check_branch
    %13 = sbr.rel (0) target = $region13
  $region12: #{gcn_forward.7} parent=0 // pred_region
    _
  $region13: #{gcn_forward.7} parent=0 // pred_fallthru
    _
  %p14 = scmp.eq.s32.totalorder 0, 0
  // Predicated region
  $region14: #{gcn_forward.7} parent=0 // pred_check
    %p15 = pneg %p14
  $region15: #{gcn_forward.7} parent=0 // pred_check_branch
    %17 = sbr.rel (%p15) target = $region17
  $region16: #{gcn_forward.7} parent=0 // pred_region
    %18 = vst [vmem:[#allocation2] sm:$0xff] 0.0
    %19 = vst [vmem:[#allocation2 + $0x8] sm:$0xff] 0.0
    %20 = vst [vmem:[#allocation2 + $0x10] sm:$0xff] 0.0
    %21 = vst [vmem:[#allocation2 + $0x18] sm:$0xff] 0.0
    %22 = vst [vmem:[#allocation2 + $0x20] sm:$0xff] 0.0
    %23 = vst [vmem:[#allocation2 + $0x28] sm:$0xff] 0.0
    %24 = vst [vmem:[#allocation2 + $0x30] sm:$0xff] 0.0
    %25 = vst [vmem:[#allocation2 + $0x38] sm:$0xff] 0.0
    %26 = vst [vmem:[#allocation2 + $0x40] sm:$0xff] 0.0
    %27 = vst [vmem:[#allocation2 + $0x48] sm:$0xff] 0.0
    %28 = vst [vmem:[#allocation2 + $0x50] sm:$0xff] 0.0
    %29 = vst [vmem:[#allocation2 + $0x58] sm:$0xff] 0.0
    %30 = vst [vmem:[#allocation2 + $0x60] sm:$0xff] 0.0
    %31 = vst [vmem:[#allocation2 + $0x68] sm:$0xff] 0.0
    %32 = vst [vmem:[#allocation2 + $0x70] sm:$0xff] 0.0
    %33 = vst [vmem:[#allocation2 + $0x78] sm:$0xff] 0.0
  $region17: #{gcn_forward.7} parent=0 // pred_fallthru
    _
  %v34 = vld [vmem:[#allocation2] sm:$0xff]
  %v35 = vld [vmem:[#allocation2 + $0x8] sm:$0xff]
  %v36 = vld [vmem:[#allocation2 + $0x10] sm:$0xff]
  %v37 = vld [vmem:[#allocation2 + $0x18] sm:$0xff]
  %v38 = vld [vmem:[#allocation2 + $0x20] sm:$0xff]
  %v39 = vld [vmem:[#allocation2 + $0x28] sm:$0xff]
  %v40 = vld [vmem:[#allocation2 + $0x30] sm:$0xff]
  %v41 = vld [vmem:[#allocation2 + $0x38] sm:$0xff]
  %v42 = vld [vmem:[#allocation2 + $0x40] sm:$0xff]
  %v43 = vld [vmem:[#allocation2 + $0x48] sm:$0xff]
  %v44 = vld [vmem:[#allocation2 + $0x50] sm:$0xff]
  %v45 = vld [vmem:[#allocation2 + $0x58] sm:$0xff]
  %v46 = vld [vmem:[#allocation2 + $0x60] sm:$0xff]
  %v47 = vld [vmem:[#allocation2 + $0x68] sm:$0xff]
  %v48 = vld [vmem:[#allocation2 + $0x70] sm:$0xff]
  %v49 = vld [vmem:[#allocation2 + $0x78] sm:$0xff]
  %v50 = vld [vmem:[%s0] sm:$0xf]
  %v51 = vld [vmem:[%s0 + $0x4] sm:$0xf]
  %v52 = vld [vmem:[%s0 + $0x8] sm:$0xf]
  %v53 = vld [vmem:[%s0 + $0xc] sm:$0xf]
  %v54 = vld [vmem:[%s0 + $0x10] sm:$0xf]
  %v55 = vld [vmem:[%s0 + $0x14] sm:$0xf]
  %v56 = vld [vmem:[%s0 + $0x18] sm:$0xf]
  %v57 = vld [vmem:[%s0 + $0x1c] sm:$0xf]
  %v58 = vld [vmem:[%s0 + $0x20] sm:$0xf]
  %v59 = vld [vmem:[%s0 + $0x24] sm:$0xf]
  %v60 = vld [vmem:[%s0 + $0x28] sm:$0xf]
  %v61 = vld [vmem:[%s0 + $0x2c] sm:$0xf]
  %v62 = vld [vmem:[%s0 + $0x30] sm:$0xf]
  %v63 = vld [vmem:[%s0 + $0x34] sm:$0xf]
  %v64 = vld [vmem:[%s0 + $0x38] sm:$0xf]
  %v65 = vld [vmem:[%s0 + $0x3c] sm:$0xf]
  %v66 = vld [vmem:[%s1] sm:$0xf]
  %v67 = vld [vmem:[%s1 + $0x4] sm:$0xf]
  %v68 = vld [vmem:[%s1 + $0x8] sm:$0xf]
  %v69 = vld [vmem:[%s1 + $0xc] sm:$0xf]
  %v70 = vld [vmem:[%s1 + $0x10] sm:$0xf]
  %v71 = vld [vmem:[%s1 + $0x14] sm:$0xf]
  %v72 = vld [vmem:[%s1 + $0x18] sm:$0xf]
  %v73 = vld [vmem:[%s1 + $0x1c] sm:$0xf]
  %v74 = vld [vmem:[%s1 + $0x20] sm:$0xf]
  %v75 = vld [vmem:[%s1 + $0x24] sm:$0xf]
  %v76 = vld [vmem:[%s1 + $0x28] sm:$0xf]
  %v77 = vld [vmem:[%s1 + $0x2c] sm:$0xf]
  %v78 = vld [vmem:[%s1 + $0x30] sm:$0xf]
  %v79 = vld [vmem:[%s1 + $0x34] sm:$0xf]
  %v80 = vld [vmem:[%s1 + $0x38] sm:$0xf]
  %v81 = vld [vmem:[%s1 + $0x3c] sm:$0xf]
  %v98 = vunpack.c.l.b16 %v50
  %v99 = vunpack.c.l.b16 %v51
  %v100 = vunpack.c.l.b16 %v52
  %v101 = vunpack.c.l.b16 %v53
  %v102 = vunpack.c.l.b16 %v54
  %v103 = vunpack.c.l.b16 %v55
  %v104 = vunpack.c.l.b16 %v56
  %v105 = vunpack.c.l.b16 %v57
  %v106 = vunpack.c.l.b16 %v58
  %v107 = vunpack.c.l.b16 %v59
  %v108 = vunpack.c.l.b16 %v60
  %v109 = vunpack.c.l.b16 %v61
  %v110 = vunpack.c.l.b16 %v62
  %v111 = vunpack.c.l.b16 %v63
  %v112 = vunpack.c.l.b16 %v64
  %v113 = vunpack.c.l.b16 %v65
  %v114 = vpack.c.b16 %v99, %v98
  %v115 = vpack.c.b16 %v101, %v100
  %v116 = vpack.c.b16 %v103, %v102
  %v117 = vpack.c.b16 %v105, %v104
  %v118 = vpack.c.b16 %v107, %v106
  %v119 = vpack.c.b16 %v109, %v108
  %v120 = vpack.c.b16 %v111, %v110
  %v121 = vpack.c.b16 %v113, %v112
  %v146 = vunpack.c.l.b16 %v66
  %v147 = vunpack.c.l.b16 %v67
  %v148 = vunpack.c.l.b16 %v68
  %v149 = vunpack.c.l.b16 %v69
  %v150 = vunpack.c.l.b16 %v70
  %v151 = vunpack.c.l.b16 %v71
  %v152 = vunpack.c.l.b16 %v72
  %v153 = vunpack.c.l.b16 %v73
  %v154 = vunpack.c.l.b16 %v74
  %v155 = vunpack.c.l.b16 %v75
  %v156 = vunpack.c.l.b16 %v76
  %v157 = vunpack.c.l.b16 %v77
  %v158 = vunpack.c.l.b16 %v78
  %v159 = vunpack.c.l.b16 %v79
  %v160 = vunpack.c.l.b16 %v80
  %v161 = vunpack.c.l.b16 %v81
  %v162 = vpack.c.b16 %v147, %v146
  %v163 = vpack.c.b16 %v149, %v148
  %v164 = vpack.c.b16 %v151, %v150
  %v165 = vpack.c.b16 %v153, %v152
  %v166 = vpack.c.b16 %v155, %v154
  %v167 = vpack.c.b16 %v157, %v156
  %v168 = vpack.c.b16 %v159, %v158
  %v169 = vpack.c.b16 %v161, %v160
  %178 = vmatpush.bf16.msra.mxu0 %v169
  %179 = vmatpush.bf16.msra.mxu0 %v168
  %180 = vmatpush.bf16.msra.mxu0 %v167
  %181 = vmatpush.bf16.msra.mxu0 %v166
  %182 = vmatpush.bf16.msra.mxu0 %v165
  %183 = vmatpush.bf16.msra.mxu0 %v164
  %184 = vmatpush.bf16.msra.mxu0 %v163
  %185 = vmatpush.bf16.msra.mxu0 %v162
  %186 = vmatmul.bf16.gmra.mxu0 %v114
  %v187 = vpop.f32.mrf.mxu0
  %v188 = vadd.f32 0.0, %v187
  %v189 = vpop.f32.mrf.mxu0
  %v190 = vadd.f32 0.0, %v189
  %191 = vmatmul.bf16.gmra.mxu0 %v115
  %v192 = vpop.f32.mrf.mxu0
  %v193 = vadd.f32 0.0, %v192
  %v194 = vpop.f32.mrf.mxu0
  %v195 = vadd.f32 0.0, %v194
  %196 = vmatmul.bf16.gmra.mxu0 %v116
  %v197 = vpop.f32.mrf.mxu0
  %v198 = vadd.f32 0.0, %v197
  %v199 = vpop.f32.mrf.mxu0
  %v200 = vadd.f32 0.0, %v199
  %201 = vmatmul.bf16.gmra.mxu0 %v117
  %v202 = vpop.f32.mrf.mxu0
  %v203 = vadd.f32 0.0, %v202
  %v204 = vpop.f32.mrf.mxu0
  %v205 = vadd.f32 0.0, %v204
  %206 = vmatmul.bf16.gmra.mxu0 %v118
  %v207 = vpop.f32.mrf.mxu0
  %v208 = vadd.f32 0.0, %v207
  %v209 = vpop.f32.mrf.mxu0
  %v210 = vadd.f32 0.0, %v209
  %211 = vmatmul.bf16.gmra.mxu0 %v119
  %v212 = vpop.f32.mrf.mxu0
  %v213 = vadd.f32 0.0, %v212
  %v214 = vpop.f32.mrf.mxu0
  %v215 = vadd.f32 0.0, %v214
  %216 = vmatmul.bf16.gmra.mxu0 %v120
  %v217 = vpop.f32.mrf.mxu0
  %v218 = vadd.f32 0.0, %v217
  %v219 = vpop.f32.mrf.mxu0
  %v220 = vadd.f32 0.0, %v219
  %221 = vmatmul.bf16.gmra.mxu0 %v121
  %v222 = vpop.f32.mrf.mxu0
  %v223 = vadd.f32 0.0, %v222
  %v224 = vpop.f32.mrf.mxu0
  %v225 = vadd.f32 0.0, %v224
  %226 = vdwg.mxu0
  %v227 = vadd.f32 %v34, %v188
  %v228 = vadd.f32 %v35, %v190
  %v229 = vadd.f32 %v36, %v193
  %v230 = vadd.f32 %v37, %v195
  %v231 = vadd.f32 %v38, %v198
  %v232 = vadd.f32 %v39, %v200
  %v233 = vadd.f32 %v40, %v203
  %v234 = vadd.f32 %v41, %v205
  %v235 = vadd.f32 %v42, %v208
  %v236 = vadd.f32 %v43, %v210
  %v237 = vadd.f32 %v44, %v213
  %v238 = vadd.f32 %v45, %v215
  %v239 = vadd.f32 %v46, %v218
  %v240 = vadd.f32 %v47, %v220
  %v241 = vadd.f32 %v48, %v223
  %v242 = vadd.f32 %v49, %v225
  %243 = vst [vmem:[#allocation2] sm:$0xff] %v227
  %244 = vst [vmem:[#allocation2 + $0x8] sm:$0xff] %v228
  %245 = vst [vmem:[#allocation2 + $0x10] sm:$0xff] %v229
  %246 = vst [vmem:[#allocation2 + $0x18] sm:$0xff] %v230
  %247 = vst [vmem:[#allocation2 + $0x20] sm:$0xff] %v231
  %248 = vst [vmem:[#allocation2 + $0x28] sm:$0xff] %v232
  %249 = vst [vmem:[#allocation2 + $0x30] sm:$0xff] %v233
  %250 = vst [vmem:[#allocation2 + $0x38] sm:$0xff] %v234
  %251 = vst [vmem:[#allocation2 + $0x40] sm:$0xff] %v235
  %252 = vst [vmem:[#allocation2 + $0x48] sm:$0xff] %v236
  %253 = vst [vmem:[#allocation2 + $0x50] sm:$0xff] %v237
  %254 = vst [vmem:[#allocation2 + $0x58] sm:$0xff] %v238
  %255 = vst [vmem:[#allocation2 + $0x60] sm:$0xff] %v239
  %256 = vst [vmem:[#allocation2 + $0x68] sm:$0xff] %v240
  %257 = vst [vmem:[#allocation2 + $0x70] sm:$0xff] %v241
  %258 = vst [vmem:[#allocation2 + $0x78] sm:$0xff] %v242
  // Predicated region
  $region18: #{gcn_forward.7} parent=0 // pred_check
    %p259 = pneg %p14
  $region19: #{gcn_forward.7} parent=0 // pred_check_branch
    %261 = sbr.rel (%p259) target = $region21
  $region20: #{gcn_forward.7} parent=0 // pred_region
    %v262 = vld [vmem:[#allocation2] sm:$0xff]
    %v263 = vld [vmem:[#allocation2 + $0x8] sm:$0xff]
    %v264 = vld [vmem:[#allocation2 + $0x10] sm:$0xff]
    %v265 = vld [vmem:[#allocation2 + $0x18] sm:$0xff]
    %v266 = vld [vmem:[#allocation2 + $0x20] sm:$0xff]
    %v267 = vld [vmem:[#allocation2 + $0x28] sm:$0xff]
    %v268 = vld [vmem:[#allocation2 + $0x30] sm:$0xff]
    %v269 = vld [vmem:[#allocation2 + $0x38] sm:$0xff]
    %v270 = vld [vmem:[#allocation2 + $0x40] sm:$0xff]
    %v271 = vld [vmem:[#allocation2 + $0x48] sm:$0xff]
    %v272 = vld [vmem:[#allocation2 + $0x50] sm:$0xff]
    %v273 = vld [vmem:[#allocation2 + $0x58] sm:$0xff]
    %v274 = vld [vmem:[#allocation2 + $0x60] sm:$0xff]
    %v275 = vld [vmem:[#allocation2 + $0x68] sm:$0xff]
    %v276 = vld [vmem:[#allocation2 + $0x70] sm:$0xff]
    %v277 = vld [vmem:[#allocation2 + $0x78] sm:$0xff]
    %v278 = vld [vmem:[%s2] sm:$0x1]
    %v280 = vperm.slane %v278, 0
    %v282 = vadd.f32 %v262, %v280
    %v283 = vadd.f32 %v263, %v280
    %v284 = vadd.f32 %v264, %v280
    %v285 = vadd.f32 %v265, %v280
    %v286 = vadd.f32 %v266, %v280
    %v287 = vadd.f32 %v267, %v280
    %v288 = vadd.f32 %v268, %v280
    %v289 = vadd.f32 %v269, %v280
    %v290 = vadd.f32 %v270, %v280
    %v291 = vadd.f32 %v271, %v280
    %v292 = vadd.f32 %v272, %v280
    %v293 = vadd.f32 %v273, %v280
    %v294 = vadd.f32 %v274, %v280
    %v295 = vadd.f32 %v275, %v280
    %v296 = vadd.f32 %v276, %v280
    %v297 = vadd.f32 %v277, %v280
    %298 = vst [vmem:[%s3] sm:$0xff] %v282
    %299 = vst [vmem:[%s3 + $0x8] sm:$0xff] %v283
    %300 = vst [vmem:[%s3 + $0x10] sm:$0xff] %v284
    %301 = vst [vmem:[%s3 + $0x18] sm:$0xff] %v285
    %302 = vst [vmem:[%s3 + $0x20] sm:$0xff] %v286
    %303 = vst [vmem:[%s3 + $0x28] sm:$0xff] %v287
    %304 = vst [vmem:[%s3 + $0x30] sm:$0xff] %v288
    %305 = vst [vmem:[%s3 + $0x38] sm:$0xff] %v289
    %306 = vst [vmem:[%s3 + $0x40] sm:$0xff] %v290
    %307 = vst [vmem:[%s3 + $0x48] sm:$0xff] %v291
    %308 = vst [vmem:[%s3 + $0x50] sm:$0xff] %v292
    %309 = vst [vmem:[%s3 + $0x58] sm:$0xff] %v293
    %310 = vst [vmem:[%s3 + $0x60] sm:$0xff] %v294
    %311 = vst [vmem:[%s3 + $0x68] sm:$0xff] %v295
    %312 = vst [vmem:[%s3 + $0x70] sm:$0xff] %v296
    %313 = vst [vmem:[%s3 + $0x78] sm:$0xff] %v297
  $region21: #{gcn_forward.7} parent=0 // pred_fallthru
    _
  // Predicated region
  $region22: #{gcn_forward.7} parent=0 // pred_check
    _
  $region23: #{gcn_forward.7} parent=0 // pred_check_branch
    %315 = sbr.rel (0) target = $region25
  $region24: #{gcn_forward.7} parent=0 // pred_region
    _
  $region25: #{gcn_forward.7} parent=0 // pred_fallthru
    _
  // Predicated region
  $region26: #{gcn_forward.7} parent=0 // pred_check
    _
  $region27: #{gcn_forward.7} parent=0 // pred_check_branch
    %317 = sbr.rel (0) target = $region29
  $region28: #{gcn_forward.7} parent=0 // pred_region
    _
  $region29: #{gcn_forward.7} parent=0 // pred_fallthru
    _

</llo_original>
